<compile_context>
chip_gen: v7x
topology: tpu7x:2x2x1
jax: 0.10.0
libtpu: 0.0.40
codegen_flags: <defaults>
</compile_context>

<pallas_src>
import math

import jax
import jax.numpy as jnp
from jax.experimental import pallas as pl
from jax.experimental.pallas import tpu as pltpu

DEFAULT_TILE_B = 4096


def _round_up(x, m):
    return ((x + m - 1) // m) * m


def _mlp_kernel(s_ref, a_ref, w1_ref, b1_ref, w2_ref, b2_ref,
                w3_ref, b3_ref, w4_ref, b4_ref, o_ref):
    """4-layer MLP on one [tile_b, ...] batch tile: bf16 MXU dots, f32 accum, VPU ReLU."""
    # Concat fused in-kernel: one K=(state_dim+action_dim) dot instead of two K=4 dots.
    x = jnp.concatenate([s_ref[...], a_ref[...]], axis=-1).astype(jnp.bfloat16)
    # Layer 1.
    h = jnp.dot(x, w1_ref[...], preferred_element_type=jnp.float32) + b1_ref[...]
    h = jnp.maximum(h, 0.0)
    # Layer 2.
    h = jnp.dot(h.astype(jnp.bfloat16), w2_ref[...],
                preferred_element_type=jnp.float32) + b2_ref[...]
    h = jnp.maximum(h, 0.0)
    # Layer 3.
    h = jnp.dot(h.astype(jnp.bfloat16), w3_ref[...],
                preferred_element_type=jnp.float32) + b3_ref[...]
    h = jnp.maximum(h, 0.0)
    # Layer 4 (logits, unpadded narrow store rides free vst slack).
    logits = jnp.dot(h.astype(jnp.bfloat16), w4_ref[...],
                     preferred_element_type=jnp.float32) + b4_ref[...]
    o_ref[...] = logits.astype(o_ref.dtype)


def prepare_params(params):
    """One-time weight prep (bf16 casts, f32 (1,out) biases). Call once, reuse every forward."""
    (w1, b1), (w2, b2), (w3, b3), (w4, b4) = params
    return (w1.astype(jnp.bfloat16), b1.reshape(1, -1).astype(jnp.float32),
            w2.astype(jnp.bfloat16), b2.reshape(1, -1).astype(jnp.float32),
            w3.astype(jnp.bfloat16), b3.reshape(1, -1).astype(jnp.float32),
            w4.astype(jnp.bfloat16), b4.reshape(1, -1).astype(jnp.float32))


def discriminator_forward(state, action, prepped, *, tile_b=DEFAULT_TILE_B):
    """state: [B, state_dim], action: [B, action_dim] -> logits [B, num_classes]."""
    w1, b1, w2, b2, w3, b3, w4, b4 = prepped
    B, state_dim = state.shape
    action_dim = action.shape[1]
    in_dim, hidden = w1.shape
    C = w4.shape[1]

    # ---- Batch tiling.
    tile_req = max(8, _round_up(int(tile_b), 8))
    # Cap so the batch grid has >=2 steps when possible (dual-TC sharding on v7x;
    # harmless on single-TC v5e/v6e).
    tile_req = min(tile_req, max(8, _round_up(pl.cdiv(B, 2), 8)))
    if B <= tile_req:
        # Single tile covering the exact batch: block == full array, no pad pass.
        tile_b, b_pad = B, B
    else:
        tile_b = tile_req
        b_pad = _round_up(B, tile_b)
        if b_pad != B:
            state = jnp.pad(state, ((0, b_pad - B), (0, 0)))
            action = jnp.pad(action, ((0, b_pad - B), (0, 0)))
    grid = (b_pad // tile_b,)

    # ---- Advisory cost estimate for the XLA scheduler.
    flops = 2 * b_pad * (in_dim * hidden + 2 * hidden * hidden + hidden * C)
    bytes_accessed = (b_pad * in_dim * 4                                   # f32 inputs
                      + b_pad * C * 4                                      # f32 logits
                      + (in_dim * hidden + 2 * hidden * hidden + hidden * C) * 2  # bf16 weights
                      + (3 * hidden + C) * 4)                              # f32 biases

    def _resident(shape):
        # Constant block index -> weights/biases stay VMEM-resident across the grid.
        return pl.BlockSpec(shape, lambda i: (0, 0))

    out = pl.pallas_call(
        _mlp_kernel,
        out_shape=jax.ShapeDtypeStruct((b_pad, C), jnp.float32),
        grid=grid,
        in_specs=[
            pl.BlockSpec((tile_b, state_dim), lambda i: (i, 0)),   # state tile
            pl.BlockSpec((tile_b, action_dim), lambda i: (i, 0)),  # action tile
            _resident((in_dim, hidden)),                           # W1
            _resident((1, hidden)),                                # b1
            _resident((hidden, hidden)),                           # W2
            _resident((1, hidden)),                                # b2
            _resident((hidden, hidden)),                           # W3
            _resident((1, hidden)),                                # b3
            _resident((hidden, C)),                                # W4 (unpadded)
            _resident((1, C)),                                     # b4 (unpadded)
        ],
        out_specs=pl.BlockSpec((tile_b, C), lambda i: (i, 0)),
        compiler_params=pltpu.CompilerParams(
            dimension_semantics=("parallel",),
            vmem_limit_bytes=32 * 1024 * 1024),
        cost_estimate=pl.CostEstimate(
            flops=flops, transcendentals=0, bytes_accessed=bytes_accessed),
    )(state, action, w1, b1, w2, b2, w3, b3, w4, b4)

    return out if b_pad == B else out[:B]


def _init_linear(key, fan_in, fan_out):
    """PyTorch nn.Linear default init: U(-1/sqrt(fan_in), 1/sqrt(fan_in))."""
    kw, kb = jax.random.split(key)
    bound = 1.0 / math.sqrt(fan_in)
    # stored [in, out] so the kernel computes x @ W
    w = jax.random.uniform(kw, (fan_in, fan_out), jnp.float32, -bound, bound)
    b = jax.random.uniform(kb, (1, fan_out), jnp.float32, -bound, bound)
    return w, b


def init_params(key, state_dim, action_dim, num_classes, hidden_dim=128):
    in_dim = state_dim + action_dim
    k1, k2, k3, k4 = jax.random.split(key, 4)
    return (
        _init_linear(k1, in_dim, hidden_dim),
        _init_linear(k2, hidden_dim, hidden_dim),
        _init_linear(k3, hidden_dim, hidden_dim),
        _init_linear(k4, hidden_dim, num_classes),
    )


def _reference_forward(state, action, params):
    """Pure-JAX f32 reference (matches the PyTorch module's forward)."""
    sa = jnp.concatenate([state, action], axis=-1)
    (w1, b1), (w2, b2), (w3, b3), (w4, b4) = params
    h = jnp.maximum(sa @ w1 + b1, 0.0)
    h = jnp.maximum(h @ w2 + b2, 0.0)
    h = jnp.maximum(h @ w3 + b3, 0.0)
    return h @ w4 + b4


if __name__ == "__main__":
    # small shapes consistent with the module's forward
    batch, state_dim, action_dim, num_classes, hidden_dim = 2, 4, 4, 8, 128

    key = jax.random.PRNGKey(0)
    k_params, k_state, k_action = jax.random.split(key, 3)

    params = init_params(k_params, state_dim, action_dim, num_classes, hidden_dim)
    state = jax.random.normal(k_state, (batch, state_dim), jnp.float32)
    action = jax.random.normal(k_action, (batch, action_dim), jnp.float32)

    prepped = prepare_params(params)          # one-time weight prep, reused per forward
    logits = discriminator_forward(state, action, prepped)
    logits = jax.block_until_ready(logits)

    ref = _reference_forward(state, action, params)
    assert logits.shape == (batch, num_classes)
    # bf16 MXU matmuls (f32 accumulation) -> relaxed tolerance vs the f32 reference.
    assert jnp.allclose(logits, ref, atol=5e-2, rtol=5e-2), "mismatch vs JAX reference"

    print("KERNEL_OK")
</pallas_src>

<mosaic_0001>
module attributes {stable_mosaic.version = 11 : i64} {
  func.func @_mlp_kernel(%arg0: i32, %arg1: memref<2x4xf32, #tpu.memory_space<vmem>>, %arg2: memref<2x4xf32, #tpu.memory_space<vmem>>, %arg3: memref<8x128xbf16, #tpu.memory_space<vmem>>, %arg4: memref<1x128xf32, #tpu.memory_space<vmem>>, %arg5: memref<128x128xbf16, #tpu.memory_space<vmem>>, %arg6: memref<1x128xf32, #tpu.memory_space<vmem>>, %arg7: memref<128x128xbf16, #tpu.memory_space<vmem>>, %arg8: memref<1x128xf32, #tpu.memory_space<vmem>>, %arg9: memref<128x8xbf16, #tpu.memory_space<vmem>>, %arg10: memref<1x8xf32, #tpu.memory_space<vmem>>, %arg11: memref<2x8xf32, #tpu.memory_space<vmem>>) attributes {dimension_semantics = [#tpu.dimension_semantics<parallel>], iteration_bounds = array<i64: 1>, scalar_prefetch = 0 : i64, scratch_operands = 0 : i64, tpu.core_type = #tpu.core_type<tc>, window_params = [{transform_indices = @transform_0, window_bounds = array<i64: 2, 4>}, {transform_indices = @transform_1, window_bounds = array<i64: 2, 4>}, {pipeline_mode = #tpu.pipeline_mode<synchronous>, transform_indices = @transform_2, window_bounds = array<i64: 8, 128>}, {pipeline_mode = #tpu.pipeline_mode<synchronous>, transform_indices = @transform_3, window_bounds = array<i64: 1, 128>}, {pipeline_mode = #tpu.pipeline_mode<synchronous>, transform_indices = @transform_4, window_bounds = array<i64: 128, 128>}, {pipeline_mode = #tpu.pipeline_mode<synchronous>, transform_indices = @transform_5, window_bounds = array<i64: 1, 128>}, {pipeline_mode = #tpu.pipeline_mode<synchronous>, transform_indices = @transform_6, window_bounds = array<i64: 128, 128>}, {pipeline_mode = #tpu.pipeline_mode<synchronous>, transform_indices = @transform_7, window_bounds = array<i64: 1, 128>}, {pipeline_mode = #tpu.pipeline_mode<synchronous>, transform_indices = @transform_8, window_bounds = array<i64: 128, 8>}, {pipeline_mode = #tpu.pipeline_mode<synchronous>, transform_indices = @transform_9, window_bounds = array<i64: 1, 8>}, {transform_indices = @transform_10, window_bounds = array<i64: 2, 8>}]} {
    %c0 = arith.constant 0 : index
    %c0_0 = arith.constant 0 : index
    %0 = vector.load %arg1[%c0, %c0_0] : memref<2x4xf32, #tpu.memory_space<vmem>>, vector<2x4xf32>
    %c0_1 = arith.constant 0 : index
    %c0_2 = arith.constant 0 : index
    %1 = vector.load %arg2[%c0_1, %c0_2] : memref<2x4xf32, #tpu.memory_space<vmem>>, vector<2x4xf32>
    %2 = tpu.concatenate %0, %1 in 1 : vector<2x4xf32>, vector<2x4xf32> -> vector<2x8xf32>
    %3 = arith.truncf %2 : vector<2x8xf32> to vector<2x8xbf16>
    %c0_3 = arith.constant 0 : index
    %c0_4 = arith.constant 0 : index
    %4 = vector.load %arg3[%c0_3, %c0_4] : memref<8x128xbf16, #tpu.memory_space<vmem>>, vector<8x128xbf16>
    %cst = arith.constant dense<0.000000e+00> : vector<2x128xf32>
    %5 = tpu.matmul %3, %4, %cst {dimension_numbers = #tpu.dot_dimension_numbers<[1], [0], [0], [1], [0, 0, 1, 1], [], []>} : vector<2x8xbf16>, vector<8x128xbf16>, vector<2x128xf32> -> vector<2x128xf32>
    %c0_5 = arith.constant 0 : index
    %c0_6 = arith.constant 0 : index
    %6 = vector.load %arg4[%c0_5, %c0_6] : memref<1x128xf32, #tpu.memory_space<vmem>>, vector<1x128xf32>
    %7 = vector.broadcast %6 : vector<1x128xf32> to vector<2x128xf32>
    %8 = arith.addf %5, %7 : vector<2x128xf32>
    %cst_7 = arith.constant 0.000000e+00 : f32
    %9 = vector.broadcast %cst_7 : f32 to vector<2x128xf32>
    %10 = arith.maximumf %8, %9 : vector<2x128xf32>
    %11 = arith.truncf %10 : vector<2x128xf32> to vector<2x128xbf16>
    %c0_8 = arith.constant 0 : index
    %c0_9 = arith.constant 0 : index
    %12 = vector.load %arg5[%c0_8, %c0_9] : memref<128x128xbf16, #tpu.memory_space<vmem>>, vector<128x128xbf16>
    %cst_10 = arith.constant dense<0.000000e+00> : vector<2x128xf32>
    %13 = tpu.matmul %11, %12, %cst_10 {dimension_numbers = #tpu.dot_dimension_numbers<[1], [0], [0], [1], [0, 0, 1, 1], [], []>} : vector<2x128xbf16>, vector<128x128xbf16>, vector<2x128xf32> -> vector<2x128xf32>
    %c0_11 = arith.constant 0 : index
    %c0_12 = arith.constant 0 : index
    %14 = vector.load %arg6[%c0_11, %c0_12] : memref<1x128xf32, #tpu.memory_space<vmem>>, vector<1x128xf32>
    %15 = vector.broadcast %14 : vector<1x128xf32> to vector<2x128xf32>
    %16 = arith.addf %13, %15 : vector<2x128xf32>
    %cst_13 = arith.constant 0.000000e+00 : f32
    %17 = vector.broadcast %cst_13 : f32 to vector<2x128xf32>
    %18 = arith.maximumf %16, %17 : vector<2x128xf32>
    %19 = arith.truncf %18 : vector<2x128xf32> to vector<2x128xbf16>
    %c0_14 = arith.constant 0 : index
    %c0_15 = arith.constant 0 : index
    %20 = vector.load %arg7[%c0_14, %c0_15] : memref<128x128xbf16, #tpu.memory_space<vmem>>, vector<128x128xbf16>
    %cst_16 = arith.constant dense<0.000000e+00> : vector<2x128xf32>
    %21 = tpu.matmul %19, %20, %cst_16 {dimension_numbers = #tpu.dot_dimension_numbers<[1], [0], [0], [1], [0, 0, 1, 1], [], []>} : vector<2x128xbf16>, vector<128x128xbf16>, vector<2x128xf32> -> vector<2x128xf32>
    %c0_17 = arith.constant 0 : index
    %c0_18 = arith.constant 0 : index
    %22 = vector.load %arg8[%c0_17, %c0_18] : memref<1x128xf32, #tpu.memory_space<vmem>>, vector<1x128xf32>
    %23 = vector.broadcast %22 : vector<1x128xf32> to vector<2x128xf32>
    %24 = arith.addf %21, %23 : vector<2x128xf32>
    %cst_19 = arith.constant 0.000000e+00 : f32
    %25 = vector.broadcast %cst_19 : f32 to vector<2x128xf32>
    %26 = arith.maximumf %24, %25 : vector<2x128xf32>
    %27 = arith.truncf %26 : vector<2x128xf32> to vector<2x128xbf16>
    %c0_20 = arith.constant 0 : index
    %c0_21 = arith.constant 0 : index
    %28 = vector.load %arg9[%c0_20, %c0_21] : memref<128x8xbf16, #tpu.memory_space<vmem>>, vector<128x8xbf16>
    %cst_22 = arith.constant dense<0.000000e+00> : vector<2x8xf32>
    %29 = tpu.matmul %27, %28, %cst_22 {dimension_numbers = #tpu.dot_dimension_numbers<[1], [0], [0], [1], [0, 0, 1, 1], [], []>} : vector<2x128xbf16>, vector<128x8xbf16>, vector<2x8xf32> -> vector<2x8xf32>
    %c0_23 = arith.constant 0 : index
    %c0_24 = arith.constant 0 : index
    %30 = vector.load %arg10[%c0_23, %c0_24] : memref<1x8xf32, #tpu.memory_space<vmem>>, vector<1x8xf32>
    %31 = vector.broadcast %30 : vector<1x8xf32> to vector<2x8xf32>
    %32 = arith.addf %29, %31 : vector<2x8xf32>
    %c0_25 = arith.constant 0 : index
    %c0_26 = arith.constant 0 : index
    %33 = vector.load %arg11[%c0_25, %c0_26] : memref<2x8xf32, #tpu.memory_space<vmem>>, vector<2x8xf32>
    tpu.vector_store %arg11[%c0_25, %c0_26], %32 {strides = array<i32>} : memref<2x8xf32, #tpu.memory_space<vmem>>, vector<2x8xf32>,
    return
  }
  func.func @transform_0(%arg0: i32) -> (i32, i32) {
    %c0_i32 = arith.constant 0 : i32
    %c0_i32_0 = arith.constant 0 : i32
    return %arg0, %c0_i32 : i32, i32
  }
  func.func @transform_1(%arg0: i32) -> (i32, i32) {
    %c0_i32 = arith.constant 0 : i32
    %c0_i32_0 = arith.constant 0 : i32
    return %arg0, %c0_i32 : i32, i32
  }
  func.func @transform_2(%arg0: i32) -> (i32, i32) {
    %c0_i32 = arith.constant 0 : i32
    %c0_i32_0 = arith.constant 0 : i32
    %c0_i32_1 = arith.constant 0 : i32
    return %c0_i32, %c0_i32_0 : i32, i32
  }
  func.func @transform_3(%arg0: i32) -> (i32, i32) {
    %c0_i32 = arith.constant 0 : i32
    %c0_i32_0 = arith.constant 0 : i32
    %c0_i32_1 = arith.constant 0 : i32
    return %c0_i32, %c0_i32_0 : i32, i32
  }
  func.func @transform_4(%arg0: i32) -> (i32, i32) {
    %c0_i32 = arith.constant 0 : i32
    %c0_i32_0 = arith.constant 0 : i32
    %c0_i32_1 = arith.constant 0 : i32
    return %c0_i32, %c0_i32_0 : i32, i32
  }
  func.func @transform_5(%arg0: i32) -> (i32, i32) {
    %c0_i32 = arith.constant 0 : i32
    %c0_i32_0 = arith.constant 0 : i32
    %c0_i32_1 = arith.constant 0 : i32
    return %c0_i32, %c0_i32_0 : i32, i32
  }
  func.func @transform_6(%arg0: i32) -> (i32, i32) {
    %c0_i32 = arith.constant 0 : i32
    %c0_i32_0 = arith.constant 0 : i32
    %c0_i32_1 = arith.constant 0 : i32
    return %c0_i32, %c0_i32_0 : i32, i32
  }
  func.func @transform_7(%arg0: i32) -> (i32, i32) {
    %c0_i32 = arith.constant 0 : i32
    %c0_i32_0 = arith.constant 0 : i32
    %c0_i32_1 = arith.constant 0 : i32
    return %c0_i32, %c0_i32_0 : i32, i32
  }
  func.func @transform_8(%arg0: i32) -> (i32, i32) {
    %c0_i32 = arith.constant 0 : i32
    %c0_i32_0 = arith.constant 0 : i32
    %c0_i32_1 = arith.constant 0 : i32
    return %c0_i32, %c0_i32_0 : i32, i32
  }
  func.func @transform_9(%arg0: i32) -> (i32, i32) {
    %c0_i32 = arith.constant 0 : i32
    %c0_i32_0 = arith.constant 0 : i32
    %c0_i32_1 = arith.constant 0 : i32
    return %c0_i32, %c0_i32_0 : i32, i32
  }
  func.func @transform_10(%arg0: i32) -> (i32, i32) {
    %c0_i32 = arith.constant 0 : i32
    %c0_i32_0 = arith.constant 0 : i32
    return %arg0, %c0_i32 : i32, i32
  }
}

</mosaic_0001>

<llo_original>
// kernel: tpu_custom_call.1
$region0: #{tpu_custom_call.1}
  #allocation0 [shape = 'u32[]', space=smem, size = 0x4, offset = 0x4, fixed_abs, tag = 'smem constant byte address 0x4 - core index']
  #allocation1 [shape = 'u32[144,128]{1,0:T(1,128)}', space=vmem, size = 0x12000, scoped, tag = 'internal scratch']
  %s0 = inlined_call_operand.vmem [shape: f32[2,4], index: 0, kind: input, shape index: {}]
  %s1 = inlined_call_operand.vmem [shape: f32[2,4], index: 1, kind: input, shape index: {}]
  %s2 = inlined_call_operand.vmem [shape: bf16[8,128], index: 2, kind: input, shape index: {}]
  %s3 = inlined_call_operand.vmem [shape: f32[1,128], index: 3, kind: input, shape index: {}]
  %s4 = inlined_call_operand.vmem [shape: bf16[128,128], index: 4, kind: input, shape index: {}]
  %s5 = inlined_call_operand.vmem [shape: f32[1,128], index: 5, kind: input, shape index: {}]
  %s6 = inlined_call_operand.hbm [shape: bf16[128,128], index: 6, kind: input, shape index: {}]
  %s7 = inlined_call_operand.vmem [shape: f32[1,128], index: 7, kind: input, shape index: {}]
  %s8 = inlined_call_operand.vmem [shape: bf16[128,8], index: 8, kind: input, shape index: {}]
  %s9 = inlined_call_operand.vmem [shape: f32[1,8], index: 9, kind: input, shape index: {}]
  %s10 = inlined_call_operand.hbm [shape: f32[2,8], index: 10, kind: output, shape index: {}]
  %s11 = sld [smem:[#allocation0]]
  $region54: #{tpu_custom_call.1} parent=0
    _
  %s13 = ssub.s32 1, %s11
  %s14 = scalar_select 0, %s13, %s11
  $region1: #{tpu_custom_call.1} parent=0
    #allocation2 [shape = 'u8[32768]{0}', space=vmem, size = 0x8000, scoped, tag = 'input window, operand 6, single buffered']
    #allocation3 [shape = 's32[1]{0}', space=sflag, size = 0x4, scoped, tag = 'scoped memory for tpu_custom_call.1']
    #allocation4 [shape = 's32[1]{0}', space=sflag, size = 0x4, scoped, tag = 'scoped memory for tpu_custom_call.1']
    #allocation5 [shape = 'u8[1024]{0}', space=vmem, size = 0x400, scoped, tag = 'output window, operand 0, single buffered']
    %15 = vsyncpa [#allocation3], 0
    %16 = vsyncpa [#allocation4], 0
    // Predicated region
    $region2: #{tpu_custom_call.1} parent=1 // pred_check
      _
    $region3: #{tpu_custom_call.1} parent=1 // pred_check_branch
      %18 = sbr.rel (0) target = $region5
    $region4: #{tpu_custom_call.1} parent=1 // pred_region
      _
    $region5: #{tpu_custom_call.1} parent=1 // pred_fallthru
      _
    // Predicated region
    $region6: #{tpu_custom_call.1} parent=1 // pred_check
      _
    $region7: #{tpu_custom_call.1} parent=1 // pred_check_branch
      %20 = sbr.rel (0) target = $region9
    $region8: #{tpu_custom_call.1} parent=1 // pred_region
      _
    $region9: #{tpu_custom_call.1} parent=1 // pred_fallthru
      _
    // Predicated region
    $region10: #{tpu_custom_call.1} parent=1 // pred_check
      _
    $region11: #{tpu_custom_call.1} parent=1 // pred_check_branch
      %22 = sbr.rel (0) target = $region13
    $region12: #{tpu_custom_call.1} parent=1 // pred_region
      _
    $region13: #{tpu_custom_call.1} parent=1 // pred_fallthru
      _
    // Predicated region
    $region14: #{tpu_custom_call.1} parent=1 // pred_check
      _
    $region15: #{tpu_custom_call.1} parent=1 // pred_check_branch
      %24 = sbr.rel (0) target = $region17
    $region16: #{tpu_custom_call.1} parent=1 // pred_region
      _
    $region17: #{tpu_custom_call.1} parent=1 // pred_fallthru
      _
    // Predicated region
    $region18: #{tpu_custom_call.1} parent=1 // pred_check
      _
    $region19: #{tpu_custom_call.1} parent=1 // pred_check_branch
      %26 = sbr.rel (0) target = $region21
    $region20: #{tpu_custom_call.1} parent=1 // pred_region
      _
    $region21: #{tpu_custom_call.1} parent=1 // pred_fallthru
      _
    // Predicated region
    $region22: #{tpu_custom_call.1} parent=1 // pred_check
      _
    $region23: #{tpu_custom_call.1} parent=1 // pred_check_branch
      %28 = sbr.rel (0) target = $region25
    $region24: #{tpu_custom_call.1} parent=1 // pred_region
      _
    $region25: #{tpu_custom_call.1} parent=1 // pred_fallthru
      _
    // Predicated region
    $region26: #{tpu_custom_call.1} parent=1 // pred_check
      _
    $region27: #{tpu_custom_call.1} parent=1 // pred_check_branch
      %30 = sbr.rel (0) target = $region29
    $region28: #{tpu_custom_call.1} parent=1 // pred_region
      %s32 = ssub.s32 1024, 1024
      %33 = vsyncadd [#allocation3], %s32
      %s34 = sshll.u32 [#allocation2], 4
      %s35 = int_to_ptr.vmem [resolvable:$true] %s34
      %40 = dma.hbm_to_vmem [thread:$0]  %s6, 1024, %s35, [#allocation3], 64, 64, 4
    $region29: #{tpu_custom_call.1} parent=1 // pred_fallthru
      _
    // Predicated region
    $region30: #{tpu_custom_call.1} parent=1 // pred_check
      _
    $region31: #{tpu_custom_call.1} parent=1 // pred_check_branch
      %42 = sbr.rel (0) target = $region33
    $region32: #{tpu_custom_call.1} parent=1 // pred_region
      _
    $region33: #{tpu_custom_call.1} parent=1 // pred_fallthru
      _
    // Predicated region
    $region34: #{tpu_custom_call.1} parent=1 // pred_check
      _
    $region35: #{tpu_custom_call.1} parent=1 // pred_check_branch
      %44 = sbr.rel (0) target = $region37
    $region36: #{tpu_custom_call.1} parent=1 // pred_region
      _
    $region37: #{tpu_custom_call.1} parent=1 // pred_fallthru
      _
    // Predicated region
    $region38: #{tpu_custom_call.1} parent=1 // pred_check
      _
    $region39: #{tpu_custom_call.1} parent=1 // pred_check_branch
      %46 = sbr.rel (0) target = $region41
    $region40: #{tpu_custom_call.1} parent=1 // pred_region
      _
    $region41: #{tpu_custom_call.1} parent=1 // pred_fallthru
      _
    // Predicated region
    $region42: #{tpu_custom_call.1} parent=1 // pred_check
      _
    $region43: #{tpu_custom_call.1} parent=1 // pred_check_branch
      %48 = sbr.rel (0) target = $region45
    $region44: #{tpu_custom_call.1} parent=1 // pred_region
      %49 = dma.done [#allocation3], 1024
    $region45: #{tpu_custom_call.1} parent=1 // pred_fallthru
      _
    %v51 = vld [vmem:[%s0] sm:$0x3]
    %v52 = vld [vmem:[%s1] sm:$0x3]
    %54 = vrot.lane.b32.xlu0 %v52, 4
    %v55 = vpop.permute.xlu0 %54
    %vm57 = vcmask 31744
    %v58 = vsel %vm57, %v51, %v55
    %v59 = vpack.c.bf16 %v58, %v58
    %v60 = vld [vmem:[%s2] sm:$0xf]
    %v61 = vld [vmem:[%s3] sm:$0x1]
    %v63 = vlaneseq
    %v64 = vshrl.u32 %v63, 7
    %v65 = vsub.s32 0, %v64
    %v66 = vrot.slane %v61, %v65
    %vm68 = vcmask 64512
    %v70 = vsel %vm68, %v59, 0
    %vm72 = vcmask 1043456
    %v74 = vsel %vm72, %v60, 0
    %76 = vmatprep.subr.bf16.mxu0 0
    %77 = vmatpush1.bf16.msra.mxu0 %v74
    %78 = vmatprep.subr.bf16.mxu0 0
    %79 = vmatpush1.bf16.msra.mxu0 0
    %80 = vmatprep.subr.bf16.mxu0 0
    %81 = vmatpush1.bf16.msra.mxu0 0
    %82 = vmatprep.subr.bf16.mxu0 0
    %83 = vmatpush1.bf16.msra.mxu0 0
    %84 = vmatprep.subr.bf16.mxu0 0
    %85 = vmatpush1.bf16.msra.mxu0 0
    %86 = vmatprep.subr.bf16.mxu0 0
    %87 = vmatpush1.bf16.msra.mxu0 0
    %88 = vmatprep.subr.bf16.mxu0 0
    %89 = vmatpush1.bf16.msra.mxu0 0
    %90 = vmatprep.subr.bf16.mxu0 0
    %91 = vmatpush1.bf16.msra.mxu0 0
    %92 = vmatprep.subr.bf16.mxu0 0
    %93 = vmatpush1.bf16.msra.mxu0 0
    %94 = vmatprep.subr.bf16.mxu0 0
    %95 = vmatpush1.bf16.msra.mxu0 0
    %96 = vmatprep.subr.bf16.mxu0 0
    %97 = vmatpush1.bf16.msra.mxu0 0
    %98 = vmatprep.subr.bf16.mxu0 0
    %99 = vmatpush1.bf16.msra.mxu0 0
    %100 = vmatprep.subr.bf16.mxu0 0
    %101 = vmatpush1.bf16.msra.mxu0 0
    %102 = vmatprep.subr.bf16.mxu0 0
    %103 = vmatpush1.bf16.msra.mxu0 0
    %104 = vmatprep.subr.bf16.mxu0 0
    %105 = vmatpush1.bf16.msra.mxu0 0
    %106 = vmatprep.subr.bf16.mxu0 0
    %107 = vmatpush1.bf16.msra.mxu0 0
    %108 = vmatprep.mubr.bf16.mxu0 0
    %109 = vmatmul.mubr.bf16.gmra.mrb[0].mxu0 %v70
    %v110 = vpop.f32.mrb[0].mxu0
    %v111 = vadd.f32 %v66, %v110
    %v112 = vpop.f32.mrb[0].mxu0
    %v113 = vpop.f32.mrb[0].mxu0
    %v114 = vpop.f32.mrb[0].mxu0
    %115 = vdwg.mxu0
    %v116 = vmax.f32 %v111, 0.0
    %v117 = vpack.c.bf16 %v116, %v116
    %v118 = vld [vmem:[%s4] sm:$0xf]
    %v119 = vld [vmem:[%s4 + $0x4] sm:$0xf]
    %v120 = vld [vmem:[%s4 + $0x8] sm:$0xf]
    %v121 = vld [vmem:[%s4 + $0xc] sm:$0xf]
    %v122 = vld [vmem:[%s4 + $0x10] sm:$0xf]
    %v123 = vld [vmem:[%s4 + $0x14] sm:$0xf]
    %v124 = vld [vmem:[%s4 + $0x18] sm:$0xf]
    %v125 = vld [vmem:[%s4 + $0x1c] sm:$0xf]
    %v126 = vld [vmem:[%s4 + $0x20] sm:$0xf]
    %v127 = vld [vmem:[%s4 + $0x24] sm:$0xf]
    %v128 = vld [vmem:[%s4 + $0x28] sm:$0xf]
    %v129 = vld [vmem:[%s4 + $0x2c] sm:$0xf]
    %v130 = vld [vmem:[%s4 + $0x30] sm:$0xf]
    %v131 = vld [vmem:[%s4 + $0x34] sm:$0xf]
    %v132 = vld [vmem:[%s4 + $0x38] sm:$0xf]
    %v133 = vld [vmem:[%s4 + $0x3c] sm:$0xf]
    %v134 = vld [vmem:[%s5] sm:$0x1]
    %v136 = vlaneseq
    %v137 = vshrl.u32 %v136, 7
    %v138 = vsub.s32 0, %v137
    %v139 = vrot.slane %v134, %v138
    %v157 = vunpack.c.l.b16 %v118
    %v158 = vunpack.c.l.b16 %v119
    %v159 = vunpack.c.l.b16 %v120
    %v160 = vunpack.c.l.b16 %v121
    %v161 = vunpack.c.l.b16 %v122
    %v162 = vunpack.c.l.b16 %v123
    %v163 = vunpack.c.l.b16 %v124
    %v164 = vunpack.c.l.b16 %v125
    %v165 = vunpack.c.l.b16 %v126
    %v166 = vunpack.c.l.b16 %v127
    %v167 = vunpack.c.l.b16 %v128
    %v168 = vunpack.c.l.b16 %v129
    %v169 = vunpack.c.l.b16 %v130
    %v170 = vunpack.c.l.b16 %v131
    %v171 = vunpack.c.l.b16 %v132
    %v172 = vunpack.c.l.b16 %v133
    %v173 = vpack.c.b16 %v158, %v157
    %v174 = vpack.c.b16 %v160, %v159
    %v175 = vpack.c.b16 %v162, %v161
    %v176 = vpack.c.b16 %v164, %v163
    %v177 = vpack.c.b16 %v166, %v165
    %v178 = vpack.c.b16 %v168, %v167
    %v179 = vpack.c.b16 %v170, %v169
    %v180 = vpack.c.b16 %v172, %v171
    %189 = vmatprep.subr.bf16.mxu0 0
    %190 = vmatpush1.bf16.msra.mxu0 %v173
    %191 = vmatprep.subr.bf16.mxu0 0
    %192 = vmatpush1.bf16.msra.mxu0 %v174
    %193 = vmatprep.subr.bf16.mxu0 0
    %194 = vmatpush1.bf16.msra.mxu0 %v175
    %195 = vmatprep.subr.bf16.mxu0 0
    %196 = vmatpush1.bf16.msra.mxu0 %v176
    %197 = vmatprep.subr.bf16.mxu0 0
    %198 = vmatpush1.bf16.msra.mxu0 %v177
    %199 = vmatprep.subr.bf16.mxu0 0
    %200 = vmatpush1.bf16.msra.mxu0 %v178
    %201 = vmatprep.subr.bf16.mxu0 0
    %202 = vmatpush1.bf16.msra.mxu0 %v179
    %203 = vmatprep.subr.bf16.mxu0 0
    %204 = vmatpush1.bf16.msra.mxu0 %v180
    %205 = vmatprep.subr.bf16.mxu0 0
    %206 = vmatpush1.bf16.msra.mxu0 0
    %207 = vmatprep.subr.bf16.mxu0 0
    %208 = vmatpush1.bf16.msra.mxu0 0
    %209 = vmatprep.subr.bf16.mxu0 0
    %210 = vmatpush1.bf16.msra.mxu0 0
    %211 = vmatprep.subr.bf16.mxu0 0
    %212 = vmatpush1.bf16.msra.mxu0 0
    %213 = vmatprep.subr.bf16.mxu0 0
    %214 = vmatpush1.bf16.msra.mxu0 0
    %215 = vmatprep.subr.bf16.mxu0 0
    %216 = vmatpush1.bf16.msra.mxu0 0
    %217 = vmatprep.subr.bf16.mxu0 0
    %218 = vmatpush1.bf16.msra.mxu0 0
    %219 = vmatprep.subr.bf16.mxu0 0
    %220 = vmatpush1.bf16.msra.mxu0 0
    %221 = vmatprep.mubr.bf16.mxu0 0
    %222 = vmatmul.mubr.bf16.gmra.mrb[0].mxu0 %v117
    %v223 = vpop.f32.mrb[0].mxu0
    %v224 = vadd.f32 %v139, %v223
    %v225 = vpop.f32.mrb[0].mxu0
    %v226 = vpop.f32.mrb[0].mxu0
    %v227 = vpop.f32.mrb[0].mxu0
    %228 = vdwg.mxu0
    %v229 = vmax.f32 %v224, 0.0
    %v230 = vpack.c.bf16 %v229, %v229
    %v231 = vld [vmem:[#allocation2] sm:$0xf]
    %v232 = vld [vmem:[#allocation2 + $0x4] sm:$0xf]
    %v233 = vld [vmem:[#allocation2 + $0x8] sm:$0xf]
    %v234 = vld [vmem:[#allocation2 + $0xc] sm:$0xf]
    %v235 = vld [vmem:[#allocation2 + $0x10] sm:$0xf]
    %v236 = vld [vmem:[#allocation2 + $0x14] sm:$0xf]
    %v237 = vld [vmem:[#allocation2 + $0x18] sm:$0xf]
    %v238 = vld [vmem:[#allocation2 + $0x1c] sm:$0xf]
    %v239 = vld [vmem:[#allocation2 + $0x20] sm:$0xf]
    %v240 = vld [vmem:[#allocation2 + $0x24] sm:$0xf]
    %v241 = vld [vmem:[#allocation2 + $0x28] sm:$0xf]
    %v242 = vld [vmem:[#allocation2 + $0x2c] sm:$0xf]
    %v243 = vld [vmem:[#allocation2 + $0x30] sm:$0xf]
    %v244 = vld [vmem:[#allocation2 + $0x34] sm:$0xf]
    %v245 = vld [vmem:[#allocation2 + $0x38] sm:$0xf]
    %v246 = vld [vmem:[#allocation2 + $0x3c] sm:$0xf]
    %v247 = vld [vmem:[%s7] sm:$0x1]
    %v249 = vlaneseq
    %v250 = vshrl.u32 %v249, 7
    %v251 = vsub.s32 0, %v250
    %v252 = vrot.slane %v247, %v251
    %v270 = vunpack.c.l.b16 %v231
    %v271 = vunpack.c.l.b16 %v232
    %v272 = vunpack.c.l.b16 %v233
    %v273 = vunpack.c.l.b16 %v234
    %v274 = vunpack.c.l.b16 %v235
    %v275 = vunpack.c.l.b16 %v236
    %v276 = vunpack.c.l.b16 %v237
    %v277 = vunpack.c.l.b16 %v238
    %v278 = vunpack.c.l.b16 %v239
    %v279 = vunpack.c.l.b16 %v240
    %v280 = vunpack.c.l.b16 %v241
    %v281 = vunpack.c.l.b16 %v242
    %v282 = vunpack.c.l.b16 %v243
    %v283 = vunpack.c.l.b16 %v244
    %v284 = vunpack.c.l.b16 %v245
    %v285 = vunpack.c.l.b16 %v246
    %v286 = vpack.c.b16 %v271, %v270
    %v287 = vpack.c.b16 %v273, %v272
    %v288 = vpack.c.b16 %v275, %v274
    %v289 = vpack.c.b16 %v277, %v276
    %v290 = vpack.c.b16 %v279, %v278
    %v291 = vpack.c.b16 %v281, %v280
    %v292 = vpack.c.b16 %v283, %v282
    %v293 = vpack.c.b16 %v285, %v284
    %302 = vmatprep.subr.bf16.mxu0 0
    %303 = vmatpush1.bf16.msra.mxu0 %v286
    %304 = vmatprep.subr.bf16.mxu0 0
    %305 = vmatpush1.bf16.msra.mxu0 %v287
    %306 = vmatprep.subr.bf16.mxu0 0
    %307 = vmatpush1.bf16.msra.mxu0 %v288
    %308 = vmatprep.subr.bf16.mxu0 0
    %309 = vmatpush1.bf16.msra.mxu0 %v289
    %310 = vmatprep.subr.bf16.mxu0 0
    %311 = vmatpush1.bf16.msra.mxu0 %v290
    %312 = vmatprep.subr.bf16.mxu0 0
    %313 = vmatpush1.bf16.msra.mxu0 %v291
    %314 = vmatprep.subr.bf16.mxu0 0
    %315 = vmatpush1.bf16.msra.mxu0 %v292
    %316 = vmatprep.subr.bf16.mxu0 0
    %317 = vmatpush1.bf16.msra.mxu0 %v293
    %318 = vmatprep.subr.bf16.mxu0 0
    %319 = vmatpush1.bf16.msra.mxu0 0
    %320 = vmatprep.subr.bf16.mxu0 0
    %321 = vmatpush1.bf16.msra.mxu0 0
    %322 = vmatprep.subr.bf16.mxu0 0
    %323 = vmatpush1.bf16.msra.mxu0 0
    %324 = vmatprep.subr.bf16.mxu0 0
    %325 = vmatpush1.bf16.msra.mxu0 0
    %326 = vmatprep.subr.bf16.mxu0 0
    %327 = vmatpush1.bf16.msra.mxu0 0
    %328 = vmatprep.subr.bf16.mxu0 0
    %329 = vmatpush1.bf16.msra.mxu0 0
    %330 = vmatprep.subr.bf16.mxu0 0
    %331 = vmatpush1.bf16.msra.mxu0 0
    %332 = vmatprep.subr.bf16.mxu0 0
    %333 = vmatpush1.bf16.msra.mxu0 0
    %334 = vmatprep.mubr.bf16.mxu0 0
    %335 = vmatmul.mubr.bf16.gmra.mrb[0].mxu0 %v230
    %v336 = vpop.f32.mrb[0].mxu0
    %v337 = vadd.f32 %v252, %v336
    %v338 = vpop.f32.mrb[0].mxu0
    %v339 = vpop.f32.mrb[0].mxu0
    %v340 = vpop.f32.mrb[0].mxu0
    %341 = vdwg.mxu0
    %v342 = vmax.f32 %v337, 0.0
    %v343 = vpack.c.bf16 %v342, %v342
    %v344 = vld [vmem:[%s8] sm:$0xf]
    %v345 = vld [vmem:[%s8 + $0x4] sm:$0xf]
    %v346 = vld [vmem:[%s8 + $0x8] sm:$0xf]
    %v347 = vld [vmem:[%s8 + $0xc] sm:$0xf]
    %v348 = vld [vmem:[%s8 + $0x10] sm:$0xf]
    %v349 = vld [vmem:[%s8 + $0x14] sm:$0xf]
    %v350 = vld [vmem:[%s8 + $0x18] sm:$0xf]
    %v351 = vld [vmem:[%s8 + $0x1c] sm:$0xf]
    %v352 = vld [vmem:[%s8 + $0x20] sm:$0xf]
    %v353 = vld [vmem:[%s8 + $0x24] sm:$0xf]
    %v354 = vld [vmem:[%s8 + $0x28] sm:$0xf]
    %v355 = vld [vmem:[%s8 + $0x2c] sm:$0xf]
    %v356 = vld [vmem:[%s8 + $0x30] sm:$0xf]
    %v357 = vld [vmem:[%s8 + $0x34] sm:$0xf]
    %v358 = vld [vmem:[%s8 + $0x38] sm:$0xf]
    %v359 = vld [vmem:[%s8 + $0x3c] sm:$0xf]
    %v360 = vld [vmem:[%s9] sm:$0x1]
    %v362 = vlaneseq
    %v363 = vshrl.u32 %v362, 7
    %v364 = vsub.s32 0, %v363
    %v365 = vrot.slane %v360, %v364
    %v383 = vunpack.c.l.b16 %v344
    %v384 = vunpack.c.l.b16 %v345
    %v385 = vunpack.c.l.b16 %v346
    %v386 = vunpack.c.l.b16 %v347
    %v387 = vunpack.c.l.b16 %v348
    %v388 = vunpack.c.l.b16 %v349
    %v389 = vunpack.c.l.b16 %v350
    %v390 = vunpack.c.l.b16 %v351
    %v391 = vunpack.c.l.b16 %v352
    %v392 = vunpack.c.l.b16 %v353
    %v393 = vunpack.c.l.b16 %v354
    %v394 = vunpack.c.l.b16 %v355
    %v395 = vunpack.c.l.b16 %v356
    %v396 = vunpack.c.l.b16 %v357
    %v397 = vunpack.c.l.b16 %v358
    %v398 = vunpack.c.l.b16 %v359
    %v399 = vpack.c.b16 %v384, %v383
    %v400 = vpack.c.b16 %v386, %v385
    %v401 = vpack.c.b16 %v388, %v387
    %v402 = vpack.c.b16 %v390, %v389
    %v403 = vpack.c.b16 %v392, %v391
    %v404 = vpack.c.b16 %v394, %v393
    %v405 = vpack.c.b16 %v396, %v395
    %v406 = vpack.c.b16 %v398, %v397
    %415 = vmatprep.subr.bf16.mxu0 0
    %416 = vmatpush1.bf16.msra.mxu0 %v399
    %417 = vmatprep.subr.bf16.mxu0 0
    %418 = vmatpush1.bf16.msra.mxu0 %v400
    %419 = vmatprep.subr.bf16.mxu0 0
    %420 = vmatpush1.bf16.msra.mxu0 %v401
    %421 = vmatprep.subr.bf16.mxu0 0
    %422 = vmatpush1.bf16.msra.mxu0 %v402
    %423 = vmatprep.subr.bf16.mxu0 0
    %424 = vmatpush1.bf16.msra.mxu0 %v403
    %425 = vmatprep.subr.bf16.mxu0 0
    %426 = vmatpush1.bf16.msra.mxu0 %v404
    %427 = vmatprep.subr.bf16.mxu0 0
    %428 = vmatpush1.bf16.msra.mxu0 %v405
    %429 = vmatprep.subr.bf16.mxu0 0
    %430 = vmatpush1.bf16.msra.mxu0 %v406
    %431 = vmatprep.subr.bf16.mxu0 0
    %432 = vmatpush1.bf16.msra.mxu0 0
    %433 = vmatprep.subr.bf16.mxu0 0
    %434 = vmatpush1.bf16.msra.mxu0 0
    %435 = vmatprep.subr.bf16.mxu0 0
    %436 = vmatpush1.bf16.msra.mxu0 0
    %437 = vmatprep.subr.bf16.mxu0 0
    %438 = vmatpush1.bf16.msra.mxu0 0
    %439 = vmatprep.subr.bf16.mxu0 0
    %440 = vmatpush1.bf16.msra.mxu0 0
    %441 = vmatprep.subr.bf16.mxu0 0
    %442 = vmatpush1.bf16.msra.mxu0 0
    %443 = vmatprep.subr.bf16.mxu0 0
    %444 = vmatpush1.bf16.msra.mxu0 0
    %445 = vmatprep.subr.bf16.mxu0 0
    %446 = vmatpush1.bf16.msra.mxu0 0
    %447 = vmatprep.mubr.bf16.mxu0 0
    %448 = vmatmul.mubr.bf16.gmra.mrb[0].mxu0 %v343
    %v449 = vpop.f32.mrb[0].mxu0
    %v450 = vadd.f32 %v365, %v449
    %v451 = vpop.f32.mrb[0].mxu0
    %v452 = vpop.f32.mrb[0].mxu0
    %v453 = vpop.f32.mrb[0].mxu0
    %454 = vdwg.mxu0
    %vm455 = vcmask 58368
    %456 = vst.msk [vmem:[#allocation5] sm:$0x3] %vm455, %v450
    // Predicated region
    $region46: #{tpu_custom_call.1} parent=1 // pred_check
      _
    $region47: #{tpu_custom_call.1} parent=1 // pred_check_branch
      %458 = sbr.rel (0) target = $region49
    $region48: #{tpu_custom_call.1} parent=1 // pred_region
      %s460 = ssub.s32 32, 32
      %461 = vsyncadd [#allocation4], %s460
      %s463 = sshll.u32 [#allocation5], 4
      %s464 = int_to_ptr.vmem [resolvable:$true] %s463
      %466 = dma.vmem_to_hbm [thread:$0]  %s464, 32, %s10, [#allocation4]
    $region49: #{tpu_custom_call.1} parent=1 // pred_fallthru
      _
    // Predicated region
    $region50: #{tpu_custom_call.1} parent=1 // pred_check
      _
    $region51: #{tpu_custom_call.1} parent=1 // pred_check_branch
      %468 = sbr.rel (0) target = $region53
    $region52: #{tpu_custom_call.1} parent=1 // pred_region
      %469 = dma.done [#allocation4], 32
    $region53: #{tpu_custom_call.1} parent=1 // pred_fallthru
      _
    %470 = vsyncpa [#allocation3], 1
    %471 = vsyncpa [#allocation4], 1

</llo_original>
